<compile_context>
chip_gen: v7x
topology: tpu7x:2x2x1
jax: 0.10.0
libtpu: 0.0.40
codegen_flags: <defaults>
</compile_context>

<pallas_src>
import math
import numpy as np

import jax
import jax.numpy as jnp
from jax.experimental import pallas as pl
from jax.experimental.pallas import tpu as pltpu


# ----------------------------------------------------------------------------
# Clenshaw-Curtis quadrature tables (exact port of UMNN's compute_cc_weights)
# ----------------------------------------------------------------------------
def compute_cc_weights(nb_steps):
    lam = np.arange(0, nb_steps + 1, 1).reshape(-1, 1)
    lam = np.cos((lam @ lam.T) * math.pi / nb_steps)
    lam[:, 0] = 0.5
    lam[:, -1] = 0.5 * lam[:, -1]
    lam = lam * 2 / nb_steps
    W = np.arange(0, nb_steps + 1, 1).reshape(-1, 1)
    W[np.arange(1, nb_steps + 1, 2)] = 0
    W = 2 / (1 - W ** 2)
    W[0] = 1
    W[np.arange(1, nb_steps + 1, 2)] = 0
    cc_weights = (lam.T @ W).astype(np.float32).reshape(-1)          # (T,)
    steps = np.cos(
        np.arange(0, nb_steps + 1, 1).reshape(-1, 1) * math.pi / nb_steps
    ).astype(np.float32).reshape(-1)                                  # (T,)
    return cc_weights, steps


def _round_up(a, m):
    return -(-a // m) * m


# ----------------------------------------------------------------------------
# Pallas kernel: lane-packed, fully batched CC quadrature
# ----------------------------------------------------------------------------
def make_mnn_kernel(Tq, P):
    """Tq: padded node-group count (multiple of 8). P: nodes packed per vreg."""

    def kernel(x_ref, tab_ref, w2_ref, w3_ref, o_ref):
        TB = x_ref.shape[0]          # batch tile
        LW = tab_ref.shape[1]        # 128 packed lanes (P * H)
        M = TB * Tq

        # Static, 8-aligned rows of the consolidated constant table.
        r_c1 = 2 * Tq
        r_c2 = 2 * Tq + 8
        r_ms = 2 * Tq + 16

        nv = tab_ref[0:Tq, :].reshape(1, Tq, LW)            # node * v1[0,:] (packed)
        ccw = tab_ref[Tq:2 * Tq, 0:P].reshape(1, Tq, P)     # cc weights (packed)
        c1 = tab_ref[r_c1:r_c1 + 1, :].reshape(1, 1, LW)    # integrand bias 1 (packed)
        c2 = tab_ref[r_c2:r_c2 + 1, :]                      # (1, LW) integrand bias 2
        off_v = tab_ref[r_ms:r_ms + 1, 0:1].reshape(1, 1, 1)    # hyper-net offset
        sch_v = tab_ref[r_ms:r_ms + 1, 1:2].reshape(1, 1, 1)    # 0.5 * scaling
        c3_v = tab_ref[r_ms:r_ms + 1, 2:3]                  # (1, 1) integrand bias 3

        x3 = x_ref[...]                                     # (TB, 1, 1)

        # Integrand layer 1 (fan-in 1; the h-column of v1 is dead): pure VPU,
        # P quadrature nodes live side-by-side in every 128-lane vreg.
        y1 = jnp.maximum(x3 * nv + c1, 0.0)                 # (TB, Tq, LW)
        y1 = y1.reshape(M, LW)                              # trivial collapse (Tq % 8 == 0)

        # Integrand layer 2: block-diagonal (LW, LW) MXU matmul, full-lane occupancy.
        y2 = jnp.maximum(
            jnp.dot(y1, w2_ref[...], preferred_element_type=jnp.float32) + c2, 0.0)

        # Integrand layer 3: block-diagonal (LW, P) projection -> one value per node.
        y3 = jnp.dot(y2, w3_ref[...], preferred_element_type=jnp.float32) + c3_v  # (M, P)

        # ELU(y) + 1, exp argument clamped for robustness.
        f = jnp.where(y3 > 0.0, y3 + 1.0, jnp.exp(jnp.minimum(y3, 0.0)))           # (M, P)
        f3 = f.reshape(TB, Tq, P)                           # trivial split back

        # Clenshaw-Curtis weighted sum over the packed node axes (padded cc = 0).
        g = jnp.sum(f3 * ccw, axis=2, keepdims=True)        # (TB, Tq, 1)
        z = jnp.sum(g, axis=1, keepdims=True)               # (TB, 1, 1)

        # integral = z * x * 0.5 ; out = scaling * integral + offset
        o_ref[...] = sch_v * z * x3 + off_v

    return kernel


# ----------------------------------------------------------------------------
# Wrapper
# ----------------------------------------------------------------------------
def dplp_mnn_forward(x, params, steps, cc_weights, *, block_b=256):
    (w1, b1, w2, b2, w3, b3, v1, c1, v2, c2, v3, c3) = params
    del w1  # dead: multiplies h == 0*x == 0

    f32 = jnp.float32
    x = x.astype(f32)
    B = x.shape[0]
    H = v2.shape[0]
    assert H <= 128 and 128 % H == 0, "lane packing assumes hidden width divides 128"
    P = 128 // H                      # quadrature nodes packed per 128-lane vreg
    LW = P * H                        # 128
    T = steps.shape[0]                # nb_steps + 1
    Tq = _round_up(-(-T // P), 8)     # node groups, padded to a multiple of 8
    Ttot = Tq * P

    # --- hyper-net on h == 0 is batch-constant: hoisted to plain JAX ---------
    zh = jax.nn.relu(b1)                         # relu(0 @ w1 + b1)
    zh = jax.nn.relu(zh @ w2 + b2)
    out2 = zh @ w3 + b3                          # (1, 2)
    offset = out2[0, 0]
    scal_half = 0.5 * jnp.exp(out2[0, 1])        # folds the (xT - x0)/2 factor

    # --- packed constant tables (one resident VMEM operand) ------------------
    nodes = jnp.pad((steps.astype(f32) + 1.0) * 0.5, (0, Ttot - T)).reshape(Tq, P)
    ccp = jnp.pad(cc_weights.astype(f32), (0, Ttot - T)).reshape(Tq, P)

    v1row = v1[0, :].astype(f32)                                   # x-row of v1 (h-row dead)
    nv = (nodes[:, :, None] * v1row[None, None, :]).reshape(Tq, LW)   # node * v1[0,:]
    cc_row = jnp.pad(ccp, ((0, 0), (0, LW - P)))                   # (Tq, LW), lanes 0:P live
    c1p = jnp.tile(c1.astype(f32).reshape(1, H), (1, P))           # (1, LW)
    c2p = jnp.tile(c2.astype(f32).reshape(1, H), (1, P))           # (1, LW)
    misc = jnp.zeros((1, LW), f32)
    misc = misc.at[0, 0].set(offset).at[0, 1].set(scal_half).at[0, 2].set(c3[0, 0])

    def row_block(row):   # pad each single row to its own 8-row (sublane-aligned) block
        return jnp.concatenate([row, jnp.zeros((7, LW), f32)], axis=0)

    table = jnp.concatenate(
        [nv, cc_row, row_block(c1p), row_block(c2p), row_block(misc)], axis=0)
    # rows: [0:Tq) node*v1row, [Tq:2Tq) cc, 2Tq c1, 2Tq+8 c2, 2Tq+16 offset/scaling/c3

    # --- block-diagonal packed integrand weights ------------------------------
    eyeP = jnp.eye(P, dtype=f32)
    w2_bd = jnp.kron(eyeP, v2.astype(f32))       # (LW, LW)
    w3_bd = jnp.kron(eyeP, v3.astype(f32))       # (LW, P)

    # --- batch tiling: at least 2 tiles so both v7x TensorCores get work ------
    TB = min(block_b, _round_up(B, 8))
    num_tiles = -(-B // TB)
    if num_tiles < 2:
        TB = max(8, _round_up(-(-B // 2), 8))
        num_tiles = max(2, -(-B // TB))
    B_pad = num_tiles * TB
    if B_pad != B:
        x = jnp.pad(x, ((0, B_pad - B), (0, 0)))
    x3 = x.reshape(B_pad, 1, 1)

    # VMEM sizing from the real (lane-padded) footprint; capped for v7x (64 MiB).
    work_bytes = 3 * TB * Tq * LW * 4            # ~y1 + y2 + y3 live at peak, f32
    vmem_limit = int(max(32 << 20, min(48 << 20, 2 * work_bytes)))

    kernel = make_mnn_kernel(Tq, P)
    R = table.shape[0]

    out = pl.pallas_call(
        kernel,
        out_shape=jax.ShapeDtypeStruct((B_pad, 1, 1), f32),
        grid=(num_tiles,),
        in_specs=[
            pl.BlockSpec((TB, 1, 1), lambda i: (i, 0, 0)),   # x batch tile
            pl.BlockSpec((R, LW), lambda i: (0, 0)),         # consolidated constants (resident)
            pl.BlockSpec((LW, LW), lambda i: (0, 0)),        # block-diag V2 (resident)
            pl.BlockSpec((LW, P), lambda i: (0, 0)),         # block-diag V3 (resident)
        ],
        out_specs=pl.BlockSpec((TB, 1, 1), lambda i: (i, 0, 0)),
        compiler_params=pltpu.CompilerParams(
            dimension_semantics=("parallel",),               # shard batch tiles across TCs
            vmem_limit_bytes=vmem_limit,
        ),
    )(x3, table, w2_bd, w3_bd)
    return out.reshape(B_pad, 1)[:B]


# ----------------------------------------------------------------------------
# Pure-JAX reference (full-fidelity: keeps h, w1 and both rows of v1)
# ----------------------------------------------------------------------------
def mnn_reference(x, params, steps, cc):
    w1, b1, w2, b2, w3, b3, v1, c1, v2, c2, v3, c3 = params
    h = 0.0 * x
    z = jax.nn.relu(h @ w1 + b1)
    z = jax.nn.relu(z @ w2 + b2)
    out2 = z @ w3 + b3
    offset = out2[:, 0:1]
    scaling = jnp.exp(out2[:, 1:2])

    xs = x[:, None, :] * ((steps[None, :, None] + 1.0) * 0.5)        # (B, T, 1)
    hs = jnp.broadcast_to(h[:, None, :], (x.shape[0], steps.shape[0], h.shape[1]))
    inp = jnp.concatenate([xs, hs], axis=-1)                         # (B, T, 2)
    y = jax.nn.relu(inp @ v1 + c1)
    y = jax.nn.relu(y @ v2 + c2)
    y = y @ v3 + c3
    y = jnp.where(y > 0.0, y, jnp.exp(y) - 1.0) + 1.0
    z_est = jnp.sum(y * cc[None, :, None], axis=1)                   # (B, 1)
    return scaling * (z_est * x * 0.5) + offset


# ----------------------------------------------------------------------------
# Deterministic parameter init (shapes from the module's __init__; in_d = 2)
# ----------------------------------------------------------------------------
def init_params(key, in_d=2, hidden=32):
    ks = jax.random.split(key, 12)

    def lin_w(k, fan_in, fan_out):
        bound = 1.0 / math.sqrt(fan_in)
        return jax.random.uniform(k, (fan_in, fan_out), jnp.float32, -bound, bound)

    def lin_b(k, fan_in, fan_out):
        bound = 1.0 / math.sqrt(fan_in)
        return jax.random.uniform(k, (1, fan_out), jnp.float32, -bound, bound)

    # hyper-net: [in_d - 1, H, H, 2]
    w1, b1 = lin_w(ks[0], in_d - 1, hidden), lin_b(ks[1], in_d - 1, hidden)
    w2, b2 = lin_w(ks[2], hidden, hidden),   lin_b(ks[3], hidden, hidden)
    w3, b3 = lin_w(ks[4], hidden, 2),        lin_b(ks[5], hidden, 2)
    # integrand net: [in_d, H, H, 1]
    v1, c1 = lin_w(ks[6], in_d, hidden),     lin_b(ks[7], in_d, hidden)
    v2, c2 = lin_w(ks[8], hidden, hidden),   lin_b(ks[9], hidden, hidden)
    v3, c3 = lin_w(ks[10], hidden, 1),       lin_b(ks[11], hidden, 1)
    return (w1, b1, w2, b2, w3, b3, v1, c1, v2, c2, v3, c3)


if __name__ == "__main__":
    B, in_d, hidden, nb_steps = 8, 2, 32, 50

    key = jax.random.PRNGKey(0)
    kx, kp = jax.random.split(key)
    x = jax.random.normal(kx, (B, in_d - 1), jnp.float32)            # (8, 1)
    params = init_params(kp, in_d=in_d, hidden=hidden)

    cc_np, steps_np = compute_cc_weights(nb_steps)
    cc = jnp.asarray(cc_np)                                          # (51,)
    steps = jnp.asarray(steps_np)                                    # (51,)

    out = dplp_mnn_forward(x, params, steps, cc)
    out = jax.block_until_ready(out)

    ref = mnn_reference(x, params, steps, cc)
    np.testing.assert_allclose(np.asarray(out), np.asarray(ref), rtol=2e-4, atol=2e-4)

    # TODO(synk): ParallelNeuralIntegral's custom autograd backward is not needed
    # for the forward pass and is not implemented here (forward-only kernel).
    print("KERNEL_OK")
</pallas_src>

<mosaic_0001>
module attributes {stable_mosaic.version = 11 : i64} {
  func.func @kernel(%arg0: i32, %arg1: memref<8x1x1xf32, #tpu.memory_space<vmem>>, %arg2: memref<56x128xf32, #tpu.memory_space<vmem>>, %arg3: memref<128x128xf32, #tpu.memory_space<vmem>>, %arg4: memref<128x4xf32, #tpu.memory_space<vmem>>, %arg5: memref<8x1x1xf32, #tpu.memory_space<vmem>>) attributes {dimension_semantics = [#tpu.dimension_semantics<parallel>], iteration_bounds = array<i64: 2>, scalar_prefetch = 0 : i64, scratch_operands = 0 : i64, tpu.core_type = #tpu.core_type<tc>, window_params = [{transform_indices = @transform_0, window_bounds = array<i64: 8, 1, 1>}, {pipeline_mode = #tpu.pipeline_mode<synchronous>, transform_indices = @transform_1, window_bounds = array<i64: 56, 128>}, {pipeline_mode = #tpu.pipeline_mode<synchronous>, transform_indices = @transform_2, window_bounds = array<i64: 128, 128>}, {pipeline_mode = #tpu.pipeline_mode<synchronous>, transform_indices = @transform_3, window_bounds = array<i64: 128, 4>}, {transform_indices = @transform_4, window_bounds = array<i64: 8, 1, 1>}]} {
    %c0 = arith.constant 0 : index
    %c0_0 = arith.constant 0 : index
    %0 = vector.load %arg2[%c0, %c0_0] : memref<56x128xf32, #tpu.memory_space<vmem>>, vector<16x128xf32>
    %1 = vector.shape_cast %0 : vector<16x128xf32> to vector<1x16x128xf32>
    %c16 = arith.constant 16 : index
    %c0_1 = arith.constant 0 : index
    %2 = vector.load %arg2[%c16, %c0_1] : memref<56x128xf32, #tpu.memory_space<vmem>>, vector<16x4xf32>
    %3 = vector.shape_cast %2 : vector<16x4xf32> to vector<1x16x4xf32>
    %c32 = arith.constant 32 : index
    %c0_2 = arith.constant 0 : index
    %4 = vector.load %arg2[%c32, %c0_2] : memref<56x128xf32, #tpu.memory_space<vmem>>, vector<1x128xf32>
    %5 = vector.shape_cast %4 : vector<1x128xf32> to vector<1x1x128xf32>
    %c40 = arith.constant 40 : index
    %c0_3 = arith.constant 0 : index
    %6 = vector.load %arg2[%c40, %c0_3] : memref<56x128xf32, #tpu.memory_space<vmem>>, vector<1x128xf32>
    %c48 = arith.constant 48 : index
    %c0_4 = arith.constant 0 : index
    %7 = vector.load %arg2[%c48, %c0_4] : memref<56x128xf32, #tpu.memory_space<vmem>>, vector<1x1xf32>
    %8 = vector.shape_cast %7 : vector<1x1xf32> to vector<1x1x1xf32>
    %c48_5 = arith.constant 48 : index
    %c1 = arith.constant 1 : index
    %9 = vector.load %arg2[%c48_5, %c1] : memref<56x128xf32, #tpu.memory_space<vmem>>, vector<1x1xf32>
    %10 = vector.shape_cast %9 : vector<1x1xf32> to vector<1x1x1xf32>
    %c48_6 = arith.constant 48 : index
    %c2 = arith.constant 2 : index
    %11 = vector.load %arg2[%c48_6, %c2] : memref<56x128xf32, #tpu.memory_space<vmem>>, vector<1x1xf32>
    %c0_7 = arith.constant 0 : index
    %c0_8 = arith.constant 0 : index
    %c0_9 = arith.constant 0 : index
    %12 = vector.load %arg1[%c0_7, %c0_8, %c0_9] : memref<8x1x1xf32, #tpu.memory_space<vmem>>, vector<8x1x1xf32>
    %13 = vector.broadcast %12 : vector<8x1x1xf32> to vector<8x16x128xf32>
    %14 = vector.broadcast %1 : vector<1x16x128xf32> to vector<8x16x128xf32>
    %15 = arith.mulf %13, %14 : vector<8x16x128xf32>
    %16 = vector.broadcast %5 : vector<1x1x128xf32> to vector<8x16x128xf32>
    %17 = arith.addf %15, %16 : vector<8x16x128xf32>
    %cst = arith.constant 0.000000e+00 : f32
    %18 = vector.broadcast %cst : f32 to vector<8x16x128xf32>
    %19 = arith.maximumf %17, %18 : vector<8x16x128xf32>
    %20 = vector.shape_cast %19 : vector<8x16x128xf32> to vector<128x128xf32>
    %c0_10 = arith.constant 0 : index
    %c0_11 = arith.constant 0 : index
    %21 = vector.load %arg3[%c0_10, %c0_11] : memref<128x128xf32, #tpu.memory_space<vmem>>, vector<128x128xf32>
    %cst_12 = arith.constant dense<0.000000e+00> : vector<128x128xf32>
    %22 = tpu.matmul %20, %21, %cst_12 {dimension_numbers = #tpu.dot_dimension_numbers<[1], [0], [0], [1], [0, 0, 1, 1], [], []>} : vector<128x128xf32>, vector<128x128xf32>, vector<128x128xf32> -> vector<128x128xf32>
    %23 = vector.broadcast %6 : vector<1x128xf32> to vector<128x128xf32>
    %24 = arith.addf %22, %23 : vector<128x128xf32>
    %cst_13 = arith.constant 0.000000e+00 : f32
    %25 = vector.broadcast %cst_13 : f32 to vector<128x128xf32>
    %26 = arith.maximumf %24, %25 : vector<128x128xf32>
    %c0_14 = arith.constant 0 : index
    %c0_15 = arith.constant 0 : index
    %27 = vector.load %arg4[%c0_14, %c0_15] : memref<128x4xf32, #tpu.memory_space<vmem>>, vector<128x4xf32>
    %cst_16 = arith.constant dense<0.000000e+00> : vector<128x4xf32>
    %28 = tpu.matmul %26, %27, %cst_16 {dimension_numbers = #tpu.dot_dimension_numbers<[1], [0], [0], [1], [0, 0, 1, 1], [], []>} : vector<128x128xf32>, vector<128x4xf32>, vector<128x4xf32> -> vector<128x4xf32>
    %29 = vector.broadcast %11 : vector<1x1xf32> to vector<128x4xf32>
    %30 = arith.addf %28, %29 : vector<128x4xf32>
    %cst_17 = arith.constant 0.000000e+00 : f32
    %31 = vector.broadcast %cst_17 : f32 to vector<128x4xf32>
    %32 = arith.cmpf ogt, %30, %31 : vector<128x4xf32>
    %cst_18 = arith.constant 1.000000e+00 : f32
    %33 = vector.broadcast %cst_18 : f32 to vector<128x4xf32>
    %34 = arith.addf %30, %33 : vector<128x4xf32>
    %cst_19 = arith.constant 0.000000e+00 : f32
    %35 = vector.broadcast %cst_19 : f32 to vector<128x4xf32>
    %36 = arith.minimumf %30, %35 : vector<128x4xf32>
    %37 = math.exp %36 : vector<128x4xf32>
    %38 = arith.select %32, %34, %37 : vector<128x4xi1>, vector<128x4xf32>
    %39 = vector.shape_cast %38 : vector<128x4xf32> to vector<8x16x4xf32>
    %40 = vector.broadcast %3 : vector<1x16x4xf32> to vector<8x16x4xf32>
    %41 = arith.mulf %39, %40 : vector<8x16x4xf32>
    %cst_20 = arith.constant dense<0.000000e+00> : vector<8x16xf32>
    %42 = vector.multi_reduction <add>, %41, %cst_20 [2] : vector<8x16x4xf32> to vector<8x16xf32>
    %43 = vector.shape_cast %42 : vector<8x16xf32> to vector<8x16x1xf32>
    %cst_21 = arith.constant dense<0.000000e+00> : vector<8x1xf32>
    %44 = vector.multi_reduction <add>, %43, %cst_21 [1] : vector<8x16x1xf32> to vector<8x1xf32>
    %45 = vector.shape_cast %44 : vector<8x1xf32> to vector<8x1x1xf32>
    %46 = vector.broadcast %10 : vector<1x1x1xf32> to vector<8x1x1xf32>
    %47 = arith.mulf %46, %45 : vector<8x1x1xf32>
    %48 = arith.mulf %47, %12 : vector<8x1x1xf32>
    %49 = vector.broadcast %8 : vector<1x1x1xf32> to vector<8x1x1xf32>
    %50 = arith.addf %48, %49 : vector<8x1x1xf32>
    %c0_22 = arith.constant 0 : index
    %c0_23 = arith.constant 0 : index
    %c0_24 = arith.constant 0 : index
    %51 = vector.load %arg5[%c0_22, %c0_23, %c0_24] : memref<8x1x1xf32, #tpu.memory_space<vmem>>, vector<8x1x1xf32>
    tpu.vector_store %arg5[%c0_22, %c0_23, %c0_24], %50 {strides = array<i32>} : memref<8x1x1xf32, #tpu.memory_space<vmem>>, vector<8x1x1xf32>,
    return
  }
  func.func @transform_0(%arg0: i32) -> (i32, i32, i32) {
    %c0_i32 = arith.constant 0 : i32
    %c0_i32_0 = arith.constant 0 : i32
    %c0_i32_1 = arith.constant 0 : i32
    return %arg0, %c0_i32, %c0_i32_0 : i32, i32, i32
  }
  func.func @transform_1(%arg0: i32) -> (i32, i32) {
    %c0_i32 = arith.constant 0 : i32
    %c0_i32_0 = arith.constant 0 : i32
    %c0_i32_1 = arith.constant 0 : i32
    return %c0_i32, %c0_i32_0 : i32, i32
  }
  func.func @transform_2(%arg0: i32) -> (i32, i32) {
    %c0_i32 = arith.constant 0 : i32
    %c0_i32_0 = arith.constant 0 : i32
    %c0_i32_1 = arith.constant 0 : i32
    return %c0_i32, %c0_i32_0 : i32, i32
  }
  func.func @transform_3(%arg0: i32) -> (i32, i32) {
    %c0_i32 = arith.constant 0 : i32
    %c0_i32_0 = arith.constant 0 : i32
    %c0_i32_1 = arith.constant 0 : i32
    return %c0_i32, %c0_i32_0 : i32, i32
  }
  func.func @transform_4(%arg0: i32) -> (i32, i32, i32) {
    %c0_i32 = arith.constant 0 : i32
    %c0_i32_0 = arith.constant 0 : i32
    %c0_i32_1 = arith.constant 0 : i32
    return %arg0, %c0_i32, %c0_i32_0 : i32, i32, i32
  }
}

</mosaic_0001>

<llo_original>
// kernel: tpu_custom_call.1
$region0: #{tpu_custom_call.1}
  #allocation0 [shape = 'u32[]', space=smem, size = 0x4, offset = 0x4, fixed_abs, tag = 'smem constant byte address 0x4 - core index']
  #allocation1 [shape = 'u32[144,128]{1,0:T(1,128)}', space=vmem, size = 0x12000, scoped, tag = 'internal scratch']
  %s0 = inlined_call_operand.vmem [shape: f32[16,1,1], index: 0, kind: input, shape index: {}]
  %s1 = inlined_call_operand.hbm [shape: f32[56,128], index: 1, kind: input, shape index: {}]
  %s2 = inlined_call_operand.vmem [shape: f32[128,128], index: 2, kind: input, shape index: {}]
  %s3 = inlined_call_operand.vmem [shape: f32[128,4], index: 3, kind: input, shape index: {}]
  %s4 = inlined_call_operand.vmem [shape: f32[16,1,1], index: 4, kind: output, shape index: {}]
  %s5 = sld [smem:[#allocation0]]
  $region53: #{tpu_custom_call.1} parent=0
    _
  %s7 = ssub.s32 1, %s5
  %s8 = scalar_select 0, %s7, %s5
  $region1: #{tpu_custom_call.1} parent=0
    #allocation2 [shape = 'u8[28672]{0}', space=vmem, size = 0x7000, scoped, tag = 'input window, operand 1, single buffered']
    #allocation3 [shape = 's32[2]{0}', space=sflag, size = 0x8, scoped, tag = 'scoped memory for tpu_custom_call.1']
    %9 = vsyncpa [#allocation3], 0
    loop: start=0, step=1, limit=4
    $region2: #{tpu_custom_call.1} parent=1 // loop_pre_header
      _
    $region3: #{tpu_custom_call.1} parent=1 // loop_header
      %s11 = sphi 0, %s15
      %p12 = scmp.ge.s32.totalorder %s11, 4
      %s21 = sphi 0, %s23
      %s24 = sphi 0, %s21
      %s25 = sphi 0, %s24
      %s41 = sphi 0, %s25
      %s45 = sphi 0, %s45
      %s47 = sphi 0, %s45
      %s48 = sphi 0, %s47
      %s62 = sphi 0, %s48
      %s66 = sphi 0, %s66
      %s68 = sphi 0, %s66
      %s69 = sphi 0, %s68
      %s83 = sphi 0, %s69
      %s87 = sphi 0, %s87
      %s89 = sphi 0, %s87
      %s90 = sphi 0, %s89
      %s104 = sphi 0, %s90
      %s110 = sphi 0, %s112
      %s113 = sphi 0, %s110
      %s114 = sphi 0, %s113
      %s130 = sphi 0, %s114
    $region4: #{tpu_custom_call.1} parent=1 // loop_header_branch
      %14 = sbr.rel (%p12) target = $region8
    $region5: #{tpu_custom_call.1} parent=1 // loop_body
      %s16 = ssub.s32 %s11, 1
      %s17 = ssub.s32 %s11, 2
      %s18 = sadd.s32 %s11, 1
      %s19 = ssub.s32 %s11, %s18
      %p20 = scmp.eq.s32.totalorder %s19, 0
      %s22 = sadd.s32 %s21, 1
      %s23 = scalar_select %p20, %s21, %s22
      %p26 = pneg %p20
      %p27 = scmp.eq.s32.totalorder %s11, 1
      %p28 = por %p26, %p27
      %p29 = scmp.ne.s32.totalorder %s21, %s24
      %p30 = scmp.eq.s32.totalorder %s11, 0
      %p31 = por %p29, %p30
      %p32 = scmp.ne.s32.totalorder %s21, %s24
      %p33 = scmp.eq.s32.totalorder %s16, 1
      %p34 = por %p32, %p33
      %p35 = scmp.ne.s32.totalorder %s24, %s25
      %p36 = scmp.eq.s32.totalorder %s16, 0
      %p37 = por %p35, %p36
      %p38 = scmp.ne.s32.totalorder %s24, %s25
      %p39 = scmp.eq.s32.totalorder %s17, 1
      %p40 = por %p38, %p39
      %p42 = scmp.ne.s32.totalorder %s25, %s41
      %p43 = scmp.eq.s32.totalorder %s17, 0
      %p44 = por %p42, %p43
      %s46 = sadd.s32 %s45, 1
      %p49 = scmp.eq.s32.totalorder %s11, 1
      %p50 = scmp.ne.s32.totalorder %s45, %s47
      %p51 = scmp.eq.s32.totalorder %s11, 0
      %p52 = por %p50, %p51
      %p53 = scmp.ne.s32.totalorder %s45, %s47
      %p54 = scmp.eq.s32.totalorder %s16, 1
      %p55 = por %p53, %p54
      %p56 = scmp.ne.s32.totalorder %s47, %s48
      %p57 = scmp.eq.s32.totalorder %s16, 0
      %p58 = por %p56, %p57
      %p59 = scmp.ne.s32.totalorder %s47, %s48
      %p60 = scmp.eq.s32.totalorder %s17, 1
      %p61 = por %p59, %p60
      %p63 = scmp.ne.s32.totalorder %s48, %s62
      %p64 = scmp.eq.s32.totalorder %s17, 0
      %p65 = por %p63, %p64
      %s67 = sadd.s32 %s66, 1
      %p70 = scmp.eq.s32.totalorder %s11, 1
      %p71 = scmp.ne.s32.totalorder %s66, %s68
      %p72 = scmp.eq.s32.totalorder %s11, 0
      %p73 = por %p71, %p72
      %p74 = scmp.ne.s32.totalorder %s66, %s68
      %p75 = scmp.eq.s32.totalorder %s16, 1
      %p76 = por %p74, %p75
      %p77 = scmp.ne.s32.totalorder %s68, %s69
      %p78 = scmp.eq.s32.totalorder %s16, 0
      %p79 = por %p77, %p78
      %p80 = scmp.ne.s32.totalorder %s68, %s69
      %p81 = scmp.eq.s32.totalorder %s17, 1
      %p82 = por %p80, %p81
      %p84 = scmp.ne.s32.totalorder %s69, %s83
      %p85 = scmp.eq.s32.totalorder %s17, 0
      %p86 = por %p84, %p85
      %s88 = sadd.s32 %s87, 1
      %p91 = scmp.eq.s32.totalorder %s11, 1
      %p92 = scmp.ne.s32.totalorder %s87, %s89
      %p93 = scmp.eq.s32.totalorder %s11, 0
      %p94 = por %p92, %p93
      %p95 = scmp.ne.s32.totalorder %s87, %s89
      %p96 = scmp.eq.s32.totalorder %s16, 1
      %p97 = por %p95, %p96
      %p98 = scmp.ne.s32.totalorder %s89, %s90
      %p99 = scmp.eq.s32.totalorder %s16, 0
      %p100 = por %p98, %p99
      %p101 = scmp.ne.s32.totalorder %s89, %s90
      %p102 = scmp.eq.s32.totalorder %s17, 1
      %p103 = por %p101, %p102
      %p105 = scmp.ne.s32.totalorder %s90, %s104
      %p106 = scmp.eq.s32.totalorder %s17, 0
      %p107 = por %p105, %p106
      %s108 = ssub.s32 %s11, %s18
      %p109 = scmp.eq.s32.totalorder %s108, 0
      %s111 = sadd.s32 %s110, 1
      %s112 = scalar_select %p109, %s110, %s111
      %p115 = pneg %p109
      %p116 = scmp.eq.s32.totalorder %s11, 1
      %p117 = por %p115, %p116
      %p118 = scmp.ne.s32.totalorder %s110, %s113
      %p119 = scmp.eq.s32.totalorder %s11, 0
      %p120 = por %p118, %p119
      %p121 = scmp.ne.s32.totalorder %s110, %s113
      %p122 = scmp.eq.s32.totalorder %s16, 1
      %p123 = por %p121, %p122
      %p124 = scmp.ne.s32.totalorder %s113, %s114
      %p125 = scmp.eq.s32.totalorder %s16, 0
      %p126 = por %p124, %p125
      %p127 = scmp.ne.s32.totalorder %s113, %s114
      %p128 = scmp.eq.s32.totalorder %s17, 1
      %p129 = por %p127, %p128
      %p131 = scmp.ne.s32.totalorder %s114, %s130
      %p132 = scmp.eq.s32.totalorder %s17, 0
      %p133 = por %p131, %p132
      %p134 = scmp.le.s32.totalorder 1, %s11
      %p135 = scmp.lt.s32.totalorder %s11, 3
      %p136 = pnand %p134, %p135
      %p137 = pneg %p136
      // Predicated region
      $region9: #{tpu_custom_call.1} parent=5 // pred_check
        _
      $region10: #{tpu_custom_call.1} parent=5 // pred_check_branch
        %139 = sbr.rel (%p136) target = $region12
      $region11: #{tpu_custom_call.1} parent=5 // pred_region
        %s140 = ssub.s32 %s11, 1
        // Predicated region
        $region13: #{tpu_custom_call.1} parent=11 // pred_check
          %p141 = pneg %p58
        $region14: #{tpu_custom_call.1} parent=11 // pred_check_branch
          %143 = sbr.rel (%p141) target = $region16
        $region15: #{tpu_custom_call.1} parent=11 // pred_region
          %s145 = ssub.s32 896, 896
          %146 = vsyncadd [#allocation3], %s145
          %s147 = sshll.u32 [#allocation2], 4
          %s148 = int_to_ptr.vmem [resolvable:$true] %s147
          %153 = dma.hbm_to_vmem [thread:$0]  %s1, 896, %s148, [#allocation3], 128, 128, 8
        $region16: #{tpu_custom_call.1} parent=11 // pred_fallthru
          _
        // Predicated region
        $region17: #{tpu_custom_call.1} parent=11 // pred_check
          %p154 = pneg %p79
        $region18: #{tpu_custom_call.1} parent=11 // pred_check_branch
          %156 = sbr.rel (%p154) target = $region20
        $region19: #{tpu_custom_call.1} parent=11 // pred_region
          _
        $region20: #{tpu_custom_call.1} parent=11 // pred_fallthru
          _
        // Predicated region
        $region21: #{tpu_custom_call.1} parent=11 // pred_check
          %p157 = pneg %p100
        $region22: #{tpu_custom_call.1} parent=11 // pred_check_branch
          %159 = sbr.rel (%p157) target = $region24
        $region23: #{tpu_custom_call.1} parent=11 // pred_region
          _
        $region24: #{tpu_custom_call.1} parent=11 // pred_fallthru
          _
      $region12: #{tpu_custom_call.1} parent=5 // pred_fallthru
        _
      %p160 = scmp.lt.s32.totalorder %s11, 2
      // Predicated region
      $region25: #{tpu_custom_call.1} parent=5 // pred_check
        %p161 = pneg %p160
      $region26: #{tpu_custom_call.1} parent=5 // pred_check_branch
        %163 = sbr.rel (%p161) target = $region28
      $region27: #{tpu_custom_call.1} parent=5 // pred_region
        // Predicated region
        $region29: #{tpu_custom_call.1} parent=27 // pred_check
          %p164 = pneg %p31
        $region30: #{tpu_custom_call.1} parent=27 // pred_check_branch
          %166 = sbr.rel (%p164) target = $region32
        $region31: #{tpu_custom_call.1} parent=27 // pred_region
          %s167 = smul.u32 8, %s11
          %p168 = scmp.lt.s32.totalorder %s167, 15
          %s169 = scalar_select %p168, %s167, 15
          %s170 = scalar_lea.vmem %s0, %s169
          %s171 = smul.u32 8, %s11
        $region32: #{tpu_custom_call.1} parent=27 // pred_fallthru
          _
      $region28: #{tpu_custom_call.1} parent=5 // pred_fallthru
        _
      %p172 = scmp.le.s32.totalorder 1, %s11
      %p173 = scmp.lt.s32.totalorder %s11, 3
      %p174 = pnand %p172, %p173
      %p175 = pneg %p174
      // Predicated region
      $region33: #{tpu_custom_call.1} parent=5 // pred_check
        _
      $region34: #{tpu_custom_call.1} parent=5 // pred_check_branch
        %177 = sbr.rel (%p174) target = $region36
      $region35: #{tpu_custom_call.1} parent=5 // pred_region
        %s178 = ssub.s32 %s11, 1
        // Predicated region
        $region37: #{tpu_custom_call.1} parent=35 // pred_check
          %p179 = pneg %p58
        $region38: #{tpu_custom_call.1} parent=35 // pred_check_branch
          %181 = sbr.rel (%p179) target = $region40
        $region39: #{tpu_custom_call.1} parent=35 // pred_region
          %182 = dma.done [#allocation3], 896
        $region40: #{tpu_custom_call.1} parent=35 // pred_fallthru
          _
        %s183 = smul.u32 8, %s16
        %p184 = scmp.lt.s32.totalorder %s183, 15
        %s185 = scalar_select %p184, %s183, 15
        %s186 = scalar_lea.vmem %s0, %s185
        %p187 = pneg %p37
        %p188 = pneg %p34
        %p189 = pneg %p58
        %p190 = pneg %p55
        %p191 = pneg %p79
        %p192 = pneg %p76
        %p193 = pneg %p100
        %p194 = pneg %p97
        %p195 = pneg %p126
        %p196 = pneg %p123
        %s197 = smul.u32 8, %s16
        %p198 = scmp.lt.s32.totalorder %s197, 15
        %s199 = scalar_select %p198, %s197, 15
        %s200 = scalar_lea.vmem %s4, %s199
        %s201 = smul.u32 8, %s16
        %p202 = scmp.lt.s32.totalorder %s201, 15
        %s203 = scalar_select %p202, %s201, 15
        %s204 = scalar_lea.vmem %s0, %s203
        %s205 = smul.u32 8, %s16
        %s206 = smul.u32 8, %s16
        %p207 = scmp.lt.s32.totalorder %s206, 15
        %s208 = scalar_select %p207, %s206, 15
        %s209 = scalar_lea.vmem %s4, %s208
        %s210 = smul.u32 8, %s16
        %v211 = vld [vmem:[#allocation2] sm:$0xff]
        %v212 = vld [vmem:[#allocation2 + $0x8] sm:$0xff]
        %v213 = vld [vmem:[#allocation2 + $0x10] sm:$0xff]
        %v214 = vld [vmem:[#allocation2 + $0x18] sm:$0xff]
        %v215 = vld [vmem:[#allocation2 + $0x20] sm:$0x1]
        %v216 = vld [vmem:[#allocation2 + $0x28] sm:$0x1]
        %v217 = vld [vmem:[#allocation2 + $0x30] sm:$0x1]
        %v218 = vld [vmem:[%s204] sm:$0x1]
        %v219 = vld [vmem:[%s204 + $0x1] sm:$0x1]
        %v220 = vld [vmem:[%s204 + $0x2] sm:$0x1]
        %v221 = vld [vmem:[%s204 + $0x3] sm:$0x1]
        %v222 = vld [vmem:[%s204 + $0x4] sm:$0x1]
        %v223 = vld [vmem:[%s204 + $0x5] sm:$0x1]
        %v224 = vld [vmem:[%s204 + $0x6] sm:$0x1]
        %v225 = vld [vmem:[%s204 + $0x7] sm:$0x1]
        %v234 = vlaneseq
        %v235 = vshrl.u32 %v234, 7
        %v236 = vsub.s32 0, %v235
        %v237 = vrot.slane %v218, %v236
        %v238 = vlaneseq
        %v239 = vshrl.u32 %v238, 7
        %v240 = vsub.s32 0, %v239
        %v241 = vrot.slane %v219, %v240
        %v242 = vlaneseq
        %v243 = vshrl.u32 %v242, 7
        %v244 = vsub.s32 0, %v243
        %v245 = vrot.slane %v220, %v244
        %v246 = vlaneseq
        %v247 = vshrl.u32 %v246, 7
        %v248 = vsub.s32 0, %v247
        %v249 = vrot.slane %v221, %v248
        %v250 = vlaneseq
        %v251 = vshrl.u32 %v250, 7
        %v252 = vsub.s32 0, %v251
        %v253 = vrot.slane %v222, %v252
        %v254 = vlaneseq
        %v255 = vshrl.u32 %v254, 7
        %v256 = vsub.s32 0, %v255
        %v257 = vrot.slane %v223, %v256
        %v258 = vlaneseq
        %v259 = vshrl.u32 %v258, 7
        %v260 = vsub.s32 0, %v259
        %v261 = vrot.slane %v224, %v260
        %v262 = vlaneseq
        %v263 = vshrl.u32 %v262, 7
        %v264 = vsub.s32 0, %v263
        %v265 = vrot.slane %v225, %v264
        %266 = vset.pattern.permute.xlu0 0
        %267 = vperm.xlu0 %266, %v237
        %v268 = vpop.permute.xlu0 %267
        %270 = vset.pattern.permute.xlu0 0
        %271 = vperm.xlu0 %270, %v241
        %v272 = vpop.permute.xlu0 %271
        %274 = vset.pattern.permute.xlu0 0
        %275 = vperm.xlu0 %274, %v245
        %v276 = vpop.permute.xlu0 %275
        %278 = vset.pattern.permute.xlu0 0
        %279 = vperm.xlu0 %278, %v249
        %v280 = vpop.permute.xlu0 %279
        %282 = vset.pattern.permute.xlu0 0
        %283 = vperm.xlu0 %282, %v253
        %v284 = vpop.permute.xlu0 %283
        %286 = vset.pattern.permute.xlu0 0
        %287 = vperm.xlu0 %286, %v257
        %v288 = vpop.permute.xlu0 %287
        %290 = vset.pattern.permute.xlu0 0
        %291 = vperm.xlu0 %290, %v261
        %v292 = vpop.permute.xlu0 %291
        %294 = vset.pattern.permute.xlu0 0
        %295 = vperm.xlu0 %294, %v265
        %v296 = vpop.permute.xlu0 %295
        %v298 = vmul.f32 %v268, %v211
        %v299 = vmul.f32 %v268, %v212
        %v300 = vmul.f32 %v272, %v211
        %v301 = vmul.f32 %v272, %v212
        %v302 = vmul.f32 %v276, %v211
        %v303 = vmul.f32 %v276, %v212
        %v304 = vmul.f32 %v280, %v211
        %v305 = vmul.f32 %v280, %v212
        %v306 = vmul.f32 %v284, %v211
        %v307 = vmul.f32 %v284, %v212
        %v308 = vmul.f32 %v288, %v211
        %v309 = vmul.f32 %v288, %v212
        %v310 = vmul.f32 %v292, %v211
        %v311 = vmul.f32 %v292, %v212
        %v312 = vmul.f32 %v296, %v211
        %v313 = vmul.f32 %v296, %v212
        %v314 = vlaneseq
        %v315 = vshrl.u32 %v314, 7
        %v316 = vsub.s32 0, %v315
        %v317 = vrot.slane %v215, %v316
        %v318 = vadd.f32 %v298, %v317
        %v319 = vadd.f32 %v299, %v317
        %v320 = vadd.f32 %v300, %v317
        %v321 = vadd.f32 %v301, %v317
        %v322 = vadd.f32 %v302, %v317
        %v323 = vadd.f32 %v303, %v317
        %v324 = vadd.f32 %v304, %v317
        %v325 = vadd.f32 %v305, %v317
        %v326 = vadd.f32 %v306, %v317
        %v327 = vadd.f32 %v307, %v317
        %v328 = vadd.f32 %v308, %v317
        %v329 = vadd.f32 %v309, %v317
        %v330 = vadd.f32 %v310, %v317
        %v331 = vadd.f32 %v311, %v317
        %v332 = vadd.f32 %v312, %v317
        %v333 = vadd.f32 %v313, %v317
        %v334 = vmax.f32 %v318, 0.0
        %v335 = vmax.f32 %v319, 0.0
        %v336 = vmax.f32 %v320, 0.0
        %v337 = vmax.f32 %v321, 0.0
        %v338 = vmax.f32 %v322, 0.0
        %v339 = vmax.f32 %v323, 0.0
        %v340 = vmax.f32 %v324, 0.0
        %v341 = vmax.f32 %v325, 0.0
        %v342 = vmax.f32 %v326, 0.0
        %v343 = vmax.f32 %v327, 0.0
        %v344 = vmax.f32 %v328, 0.0
        %v345 = vmax.f32 %v329, 0.0
        %v346 = vmax.f32 %v330, 0.0
        %v347 = vmax.f32 %v331, 0.0
        %v348 = vmax.f32 %v332, 0.0
        %v349 = vmax.f32 %v333, 0.0
        %v350 = vld [vmem:[%s2] sm:$0xff]
        %v351 = vld [vmem:[%s2 + $0x8] sm:$0xff]
        %v352 = vld [vmem:[%s2 + $0x10] sm:$0xff]
        %v353 = vld [vmem:[%s2 + $0x18] sm:$0xff]
        %v354 = vld [vmem:[%s2 + $0x20] sm:$0xff]
        %v355 = vld [vmem:[%s2 + $0x28] sm:$0xff]
        %v356 = vld [vmem:[%s2 + $0x30] sm:$0xff]
        %v357 = vld [vmem:[%s2 + $0x38] sm:$0xff]
        %v358 = vld [vmem:[%s2 + $0x40] sm:$0xff]
        %v359 = vld [vmem:[%s2 + $0x48] sm:$0xff]
        %v360 = vld [vmem:[%s2 + $0x50] sm:$0xff]
        %v361 = vld [vmem:[%s2 + $0x58] sm:$0xff]
        %v362 = vld [vmem:[%s2 + $0x60] sm:$0xff]
        %v363 = vld [vmem:[%s2 + $0x68] sm:$0xff]
        %v364 = vld [vmem:[%s2 + $0x70] sm:$0xff]
        %v365 = vld [vmem:[%s2 + $0x78] sm:$0xff]
        %v366 = vlaneseq
        %v367 = vshrl.u32 %v366, 7
        %v368 = vsub.s32 0, %v367
        %v369 = vrot.slane %v216, %v368
        %370 = vmatprep.subr.mxu0 0.0
        %371 = vmatpush1.msra.mxu0 %v350
        %372 = vmatprep.subr.mxu0 0.0
        %373 = vmatpush1.msra.mxu0 %v351
        %374 = vmatprep.subr.mxu0 0.0
        %375 = vmatpush1.msra.mxu0 %v352
        %376 = vmatprep.subr.mxu0 0.0
        %377 = vmatpush1.msra.mxu0 %v353
        %378 = vmatprep.subr.mxu0 0.0
        %379 = vmatpush1.msra.mxu0 %v354
        %380 = vmatprep.subr.mxu0 0.0
        %381 = vmatpush1.msra.mxu0 %v355
        %382 = vmatprep.subr.mxu0 0.0
        %383 = vmatpush1.msra.mxu0 %v356
        %384 = vmatprep.subr.mxu0 0.0
        %385 = vmatpush1.msra.mxu0 %v357
        %386 = vmatprep.subr.mxu0 0.0
        %387 = vmatpush1.msra.mxu0 %v358
        %388 = vmatprep.subr.mxu0 0.0
        %389 = vmatpush1.msra.mxu0 %v359
        %390 = vmatprep.subr.mxu0 0.0
        %391 = vmatpush1.msra.mxu0 %v360
        %392 = vmatprep.subr.mxu0 0.0
        %393 = vmatpush1.msra.mxu0 %v361
        %394 = vmatprep.subr.mxu0 0.0
        %395 = vmatpush1.msra.mxu0 %v362
        %396 = vmatprep.subr.mxu0 0.0
        %397 = vmatpush1.msra.mxu0 %v363
        %398 = vmatprep.subr.mxu0 0.0
        %399 = vmatpush1.msra.mxu0 %v364
        %400 = vmatprep.subr.mxu0 0.0
        %401 = vmatpush1.msra.mxu0 %v365
        %402 = vmatprep.subr.mxu0 0.0
        %403 = vmatpush1.msra.mxu0 0.0
        %404 = vmatprep.subr.mxu0 0.0
        %405 = vmatpush1.msra.mxu0 0.0
        %406 = vmatprep.subr.mxu0 0.0
        %407 = vmatpush1.msra.mxu0 0.0
        %408 = vmatprep.subr.mxu0 0.0
        %409 = vmatpush1.msra.mxu0 0.0
        %410 = vmatprep.subr.mxu0 0.0
        %411 = vmatpush1.msra.mxu0 0.0
        %412 = vmatprep.subr.mxu0 0.0
        %413 = vmatpush1.msra.mxu0 0.0
        %414 = vmatprep.subr.mxu0 0.0
        %415 = vmatpush1.msra.mxu0 0.0
        %416 = vmatprep.subr.mxu0 0.0
        %417 = vmatpush1.msra.mxu0 0.0
        %418 = vmatprep.subr.mxu0 0.0
        %419 = vmatpush1.msra.mxu0 0.0
        %420 = vmatprep.subr.mxu0 0.0
        %421 = vmatpush1.msra.mxu0 0.0
        %422 = vmatprep.subr.mxu0 0.0
        %423 = vmatpush1.msra.mxu0 0.0
        %424 = vmatprep.subr.mxu0 0.0
        %425 = vmatpush1.msra.mxu0 0.0
        %426 = vmatprep.subr.mxu0 0.0
        %427 = vmatpush1.msra.mxu0 0.0
        %428 = vmatprep.subr.mxu0 0.0
        %429 = vmatpush1.msra.mxu0 0.0
        %430 = vmatprep.subr.mxu0 0.0
        %431 = vmatpush1.msra.mxu0 0.0
        %432 = vmatprep.subr.mxu0 0.0
        %433 = vmatpush1.msra.mxu0 0.0
        %434 = vmatprep.mubr.f32.mxu0 0.0
        %435 = vmatmul.mubr.f32.gmra.mrb[0].mxu0 %v334
        %v436 = vpop.f32.mrb[0].mxu0
        %v437 = vadd.f32 %v369, %v436
        %v438 = vpop.f32.mrb[0].mxu0
        %439 = vmatprep.mubr.f32.mxu0 0.0
        %440 = vmatmul.mubr.f32.gmra.mrb[0].mxu0 %v335
        %v441 = vpop.f32.mrb[0].mxu0
        %v442 = vadd.f32 %v369, %v441
        %v443 = vpop.f32.mrb[0].mxu0
        %444 = vmatprep.mubr.f32.mxu0 0.0
        %445 = vmatmul.mubr.f32.gmra.mrb[0].mxu0 %v336
        %v446 = vpop.f32.mrb[0].mxu0
        %v447 = vadd.f32 %v369, %v446
        %v448 = vpop.f32.mrb[0].mxu0
        %449 = vmatprep.mubr.f32.mxu0 0.0
        %450 = vmatmul.mubr.f32.gmra.mrb[0].mxu0 %v337
        %v451 = vpop.f32.mrb[0].mxu0
        %v452 = vadd.f32 %v369, %v451
        %v453 = vpop.f32.mrb[0].mxu0
        %454 = vmatprep.mubr.f32.mxu0 0.0
        %455 = vmatmul.mubr.f32.gmra.mrb[0].mxu0 %v338
        %v456 = vpop.f32.mrb[0].mxu0
        %v457 = vadd.f32 %v369, %v456
        %v458 = vpop.f32.mrb[0].mxu0
        %459 = vmatprep.mubr.f32.mxu0 0.0
        %460 = vmatmul.mubr.f32.gmra.mrb[0].mxu0 %v339
        %v461 = vpop.f32.mrb[0].mxu0
        %v462 = vadd.f32 %v369, %v461
        %v463 = vpop.f32.mrb[0].mxu0
        %464 = vmatprep.mubr.f32.mxu0 0.0
        %465 = vmatmul.mubr.f32.gmra.mrb[0].mxu0 %v340
        %v466 = vpop.f32.mrb[0].mxu0
        %v467 = vadd.f32 %v369, %v466
        %v468 = vpop.f32.mrb[0].mxu0
        %469 = vmatprep.mubr.f32.mxu0 0.0
        %470 = vmatmul.mubr.f32.gmra.mrb[0].mxu0 %v341
        %v471 = vpop.f32.mrb[0].mxu0
        %v472 = vadd.f32 %v369, %v471
        %v473 = vpop.f32.mrb[0].mxu0
        %474 = vmatprep.mubr.f32.mxu0 0.0
        %475 = vmatmul.mubr.f32.gmra.mrb[0].mxu0 %v342
        %v476 = vpop.f32.mrb[0].mxu0
        %v477 = vadd.f32 %v369, %v476
        %v478 = vpop.f32.mrb[0].mxu0
        %479 = vmatprep.mubr.f32.mxu0 0.0
        %480 = vmatmul.mubr.f32.gmra.mrb[0].mxu0 %v343
        %v481 = vpop.f32.mrb[0].mxu0
        %v482 = vadd.f32 %v369, %v481
        %v483 = vpop.f32.mrb[0].mxu0
        %484 = vmatprep.mubr.f32.mxu0 0.0
        %485 = vmatmul.mubr.f32.gmra.mrb[0].mxu0 %v344
        %v486 = vpop.f32.mrb[0].mxu0
        %v487 = vadd.f32 %v369, %v486
        %v488 = vpop.f32.mrb[0].mxu0
        %489 = vmatprep.mubr.f32.mxu0 0.0
        %490 = vmatmul.mubr.f32.gmra.mrb[0].mxu0 %v345
        %v491 = vpop.f32.mrb[0].mxu0
        %v492 = vadd.f32 %v369, %v491
        %v493 = vpop.f32.mrb[0].mxu0
        %494 = vmatprep.mubr.f32.mxu0 0.0
        %495 = vmatmul.mubr.f32.gmra.mrb[0].mxu0 %v346
        %v496 = vpop.f32.mrb[0].mxu0
        %v497 = vadd.f32 %v369, %v496
        %v498 = vpop.f32.mrb[0].mxu0
        %499 = vmatprep.mubr.f32.mxu0 0.0
        %500 = vmatmul.mubr.f32.gmra.mrb[0].mxu0 %v347
        %v501 = vpop.f32.mrb[0].mxu0
        %v502 = vadd.f32 %v369, %v501
        %v503 = vpop.f32.mrb[0].mxu0
        %504 = vmatprep.mubr.f32.mxu0 0.0
        %505 = vmatmul.mubr.f32.gmra.mrb[0].mxu0 %v348
        %v506 = vpop.f32.mrb[0].mxu0
        %v507 = vadd.f32 %v369, %v506
        %v508 = vpop.f32.mrb[0].mxu0
        %509 = vmatprep.mubr.f32.mxu0 0.0
        %510 = vmatmul.mubr.f32.gmra.mrb[0].mxu0 %v349
        %v511 = vpop.f32.mrb[0].mxu0
        %v512 = vadd.f32 %v369, %v511
        %v513 = vpop.f32.mrb[0].mxu0
        %514 = vdwg.mxu0
        %v515 = vmax.f32 %v437, 0.0
        %v516 = vmax.f32 %v442, 0.0
        %v517 = vmax.f32 %v447, 0.0
        %v518 = vmax.f32 %v452, 0.0
        %v519 = vmax.f32 %v457, 0.0
        %v520 = vmax.f32 %v462, 0.0
        %v521 = vmax.f32 %v467, 0.0
        %v522 = vmax.f32 %v472, 0.0
        %v523 = vmax.f32 %v477, 0.0
        %v524 = vmax.f32 %v482, 0.0
        %v525 = vmax.f32 %v487, 0.0
        %v526 = vmax.f32 %v492, 0.0
        %v527 = vmax.f32 %v497, 0.0
        %v528 = vmax.f32 %v502, 0.0
        %v529 = vmax.f32 %v507, 0.0
        %v530 = vmax.f32 %v512, 0.0
        %v531 = vld [vmem:[%s3] sm:$0xff]
        %v532 = vld [vmem:[%s3 + $0x8] sm:$0xff]
        %v533 = vld [vmem:[%s3 + $0x10] sm:$0xff]
        %v534 = vld [vmem:[%s3 + $0x18] sm:$0xff]
        %v535 = vld [vmem:[%s3 + $0x20] sm:$0xff]
        %v536 = vld [vmem:[%s3 + $0x28] sm:$0xff]
        %v537 = vld [vmem:[%s3 + $0x30] sm:$0xff]
        %v538 = vld [vmem:[%s3 + $0x38] sm:$0xff]
        %v539 = vld [vmem:[%s3 + $0x40] sm:$0xff]
        %v540 = vld [vmem:[%s3 + $0x48] sm:$0xff]
        %v541 = vld [vmem:[%s3 + $0x50] sm:$0xff]
        %v542 = vld [vmem:[%s3 + $0x58] sm:$0xff]
        %v543 = vld [vmem:[%s3 + $0x60] sm:$0xff]
        %v544 = vld [vmem:[%s3 + $0x68] sm:$0xff]
        %v545 = vld [vmem:[%s3 + $0x70] sm:$0xff]
        %v546 = vld [vmem:[%s3 + $0x78] sm:$0xff]
        %548 = vrot.lane.b32.xlu0 %v217, 126
        %v549 = vpop.permute.xlu0 %548
        %s550 = vtos %v549
        %v551 = vstv %s550
        %553 = vmatprep.subr.mxu0 0.0
        %554 = vmatpush1.msra.mxu0 %v531
        %555 = vmatprep.subr.mxu0 0.0
        %556 = vmatpush1.msra.mxu0 %v532
        %557 = vmatprep.subr.mxu0 0.0
        %558 = vmatpush1.msra.mxu0 %v533
        %559 = vmatprep.subr.mxu0 0.0
        %560 = vmatpush1.msra.mxu0 %v534
        %561 = vmatprep.subr.mxu0 0.0
        %562 = vmatpush1.msra.mxu0 %v535
        %563 = vmatprep.subr.mxu0 0.0
        %564 = vmatpush1.msra.mxu0 %v536
        %565 = vmatprep.subr.mxu0 0.0
        %566 = vmatpush1.msra.mxu0 %v537
        %567 = vmatprep.subr.mxu0 0.0
        %568 = vmatpush1.msra.mxu0 %v538
        %569 = vmatprep.subr.mxu0 0.0
        %570 = vmatpush1.msra.mxu0 %v539
        %571 = vmatprep.subr.mxu0 0.0
        %572 = vmatpush1.msra.mxu0 %v540
        %573 = vmatprep.subr.mxu0 0.0
        %574 = vmatpush1.msra.mxu0 %v541
        %575 = vmatprep.subr.mxu0 0.0
        %576 = vmatpush1.msra.mxu0 %v542
        %577 = vmatprep.subr.mxu0 0.0
        %578 = vmatpush1.msra.mxu0 %v543
        %579 = vmatprep.subr.mxu0 0.0
        %580 = vmatpush1.msra.mxu0 %v544
        %581 = vmatprep.subr.mxu0 0.0
        %582 = vmatpush1.msra.mxu0 %v545
        %583 = vmatprep.subr.mxu0 0.0
        %584 = vmatpush1.msra.mxu0 %v546
        %585 = vmatprep.subr.mxu0 0.0
        %586 = vmatpush1.msra.mxu0 0.0
        %587 = vmatprep.subr.mxu0 0.0
        %588 = vmatpush1.msra.mxu0 0.0
        %589 = vmatprep.subr.mxu0 0.0
        %590 = vmatpush1.msra.mxu0 0.0
        %591 = vmatprep.subr.mxu0 0.0
        %592 = vmatpush1.msra.mxu0 0.0
        %593 = vmatprep.subr.mxu0 0.0
        %594 = vmatpush1.msra.mxu0 0.0
        %595 = vmatprep.subr.mxu0 0.0
        %596 = vmatpush1.msra.mxu0 0.0
        %597 = vmatprep.subr.mxu0 0.0
        %598 = vmatpush1.msra.mxu0 0.0
        %599 = vmatprep.subr.mxu0 0.0
        %600 = vmatpush1.msra.mxu0 0.0
        %601 = vmatprep.subr.mxu0 0.0
        %602 = vmatpush1.msra.mxu0 0.0
        %603 = vmatprep.subr.mxu0 0.0
        %604 = vmatpush1.msra.mxu0 0.0
        %605 = vmatprep.subr.mxu0 0.0
        %606 = vmatpush1.msra.mxu0 0.0
        %607 = vmatprep.subr.mxu0 0.0
        %608 = vmatpush1.msra.mxu0 0.0
        %609 = vmatprep.subr.mxu0 0.0
        %610 = vmatpush1.msra.mxu0 0.0
        %611 = vmatprep.subr.mxu0 0.0
        %612 = vmatpush1.msra.mxu0 0.0
        %613 = vmatprep.subr.mxu0 0.0
        %614 = vmatpush1.msra.mxu0 0.0
        %615 = vmatprep.subr.mxu0 0.0
        %616 = vmatpush1.msra.mxu0 0.0
        %617 = vmatprep.mubr.f32.mxu0 0.0
        %618 = vmatmul.mubr.f32.gmra.mrb[0].mxu0 %v515
        %v619 = vpop.f32.mrb[0].mxu0
        %v620 = vadd.f32 %v551, %v619
        %v621 = vpop.f32.mrb[0].mxu0
        %622 = vmatprep.mubr.f32.mxu0 0.0
        %623 = vmatmul.mubr.f32.gmra.mrb[0].mxu0 %v516
        %v624 = vpop.f32.mrb[0].mxu0
        %v625 = vadd.f32 %v551, %v624
        %v626 = vpop.f32.mrb[0].mxu0
        %627 = vmatprep.mubr.f32.mxu0 0.0
        %628 = vmatmul.mubr.f32.gmra.mrb[0].mxu0 %v517
        %v629 = vpop.f32.mrb[0].mxu0
        %v630 = vadd.f32 %v551, %v629
        %v631 = vpop.f32.mrb[0].mxu0
        %632 = vmatprep.mubr.f32.mxu0 0.0
        %633 = vmatmul.mubr.f32.gmra.mrb[0].mxu0 %v518
        %v634 = vpop.f32.mrb[0].mxu0
        %v635 = vadd.f32 %v551, %v634
        %v636 = vpop.f32.mrb[0].mxu0
        %637 = vmatprep.mubr.f32.mxu0 0.0
        %638 = vmatmul.mubr.f32.gmra.mrb[0].mxu0 %v519
        %v639 = vpop.f32.mrb[0].mxu0
        %v640 = vadd.f32 %v551, %v639
        %v641 = vpop.f32.mrb[0].mxu0
        %642 = vmatprep.mubr.f32.mxu0 0.0
        %643 = vmatmul.mubr.f32.gmra.mrb[0].mxu0 %v520
        %v644 = vpop.f32.mrb[0].mxu0
        %v645 = vadd.f32 %v551, %v644
        %v646 = vpop.f32.mrb[0].mxu0
        %647 = vmatprep.mubr.f32.mxu0 0.0
        %648 = vmatmul.mubr.f32.gmra.mrb[0].mxu0 %v521
        %v649 = vpop.f32.mrb[0].mxu0
        %v650 = vadd.f32 %v551, %v649
        %v651 = vpop.f32.mrb[0].mxu0
        %652 = vmatprep.mubr.f32.mxu0 0.0
        %653 = vmatmul.mubr.f32.gmra.mrb[0].mxu0 %v522
        %v654 = vpop.f32.mrb[0].mxu0
        %v655 = vadd.f32 %v551, %v654
        %v656 = vpop.f32.mrb[0].mxu0
        %657 = vmatprep.mubr.f32.mxu0 0.0
        %658 = vmatmul.mubr.f32.gmra.mrb[0].mxu0 %v523
        %v659 = vpop.f32.mrb[0].mxu0
        %v660 = vadd.f32 %v551, %v659
        %v661 = vpop.f32.mrb[0].mxu0
        %662 = vmatprep.mubr.f32.mxu0 0.0
        %663 = vmatmul.mubr.f32.gmra.mrb[0].mxu0 %v524
        %v664 = vpop.f32.mrb[0].mxu0
        %v665 = vadd.f32 %v551, %v664
        %v666 = vpop.f32.mrb[0].mxu0
        %667 = vmatprep.mubr.f32.mxu0 0.0
        %668 = vmatmul.mubr.f32.gmra.mrb[0].mxu0 %v525
        %v669 = vpop.f32.mrb[0].mxu0
        %v670 = vadd.f32 %v551, %v669
        %v671 = vpop.f32.mrb[0].mxu0
        %672 = vmatprep.mubr.f32.mxu0 0.0
        %673 = vmatmul.mubr.f32.gmra.mrb[0].mxu0 %v526
        %v674 = vpop.f32.mrb[0].mxu0
        %v675 = vadd.f32 %v551, %v674
        %v676 = vpop.f32.mrb[0].mxu0
        %677 = vmatprep.mubr.f32.mxu0 0.0
        %678 = vmatmul.mubr.f32.gmra.mrb[0].mxu0 %v527
        %v679 = vpop.f32.mrb[0].mxu0
        %v680 = vadd.f32 %v551, %v679
        %v681 = vpop.f32.mrb[0].mxu0
        %682 = vmatprep.mubr.f32.mxu0 0.0
        %683 = vmatmul.mubr.f32.gmra.mrb[0].mxu0 %v528
        %v684 = vpop.f32.mrb[0].mxu0
        %v685 = vadd.f32 %v551, %v684
        %v686 = vpop.f32.mrb[0].mxu0
        %687 = vmatprep.mubr.f32.mxu0 0.0
        %688 = vmatmul.mubr.f32.gmra.mrb[0].mxu0 %v529
        %v689 = vpop.f32.mrb[0].mxu0
        %v690 = vadd.f32 %v551, %v689
        %v691 = vpop.f32.mrb[0].mxu0
        %692 = vmatprep.mubr.f32.mxu0 0.0
        %693 = vmatmul.mubr.f32.gmra.mrb[0].mxu0 %v530
        %v694 = vpop.f32.mrb[0].mxu0
        %v695 = vadd.f32 %v551, %v694
        %v696 = vpop.f32.mrb[0].mxu0
        %697 = vdwg.mxu0
        %vm698 = vcmp.gt.f32.partialorder %v620, 0.0
        %vm699 = vcmp.gt.f32.partialorder %v625, 0.0
        %vm700 = vcmp.gt.f32.partialorder %v630, 0.0
        %vm701 = vcmp.gt.f32.partialorder %v635, 0.0
        %vm702 = vcmp.gt.f32.partialorder %v640, 0.0
        %vm703 = vcmp.gt.f32.partialorder %v645, 0.0
        %vm704 = vcmp.gt.f32.partialorder %v650, 0.0
        %vm705 = vcmp.gt.f32.partialorder %v655, 0.0
        %vm706 = vcmp.gt.f32.partialorder %v660, 0.0
        %vm707 = vcmp.gt.f32.partialorder %v665, 0.0
        %vm708 = vcmp.gt.f32.partialorder %v670, 0.0
        %vm709 = vcmp.gt.f32.partialorder %v675, 0.0
        %vm710 = vcmp.gt.f32.partialorder %v680, 0.0
        %vm711 = vcmp.gt.f32.partialorder %v685, 0.0
        %vm712 = vcmp.gt.f32.partialorder %v690, 0.0
        %vm713 = vcmp.gt.f32.partialorder %v695, 0.0
        %v714 = vadd.f32 %v620, 1.0
        %v715 = vadd.f32 %v625, 1.0
        %v716 = vadd.f32 %v630, 1.0
        %v717 = vadd.f32 %v635, 1.0
        %v718 = vadd.f32 %v640, 1.0
        %v719 = vadd.f32 %v645, 1.0
        %v720 = vadd.f32 %v650, 1.0
        %v721 = vadd.f32 %v655, 1.0
        %v722 = vadd.f32 %v660, 1.0
        %v723 = vadd.f32 %v665, 1.0
        %v724 = vadd.f32 %v670, 1.0
        %v725 = vadd.f32 %v675, 1.0
        %v726 = vadd.f32 %v680, 1.0
        %v727 = vadd.f32 %v685, 1.0
        %v728 = vadd.f32 %v690, 1.0
        %v729 = vadd.f32 %v695, 1.0
        %v730 = vmin.f32 %v620, 0.0
        %v731 = vmin.f32 %v625, 0.0
        %v732 = vmin.f32 %v630, 0.0
        %v733 = vmin.f32 %v635, 0.0
        %v734 = vmin.f32 %v640, 0.0
        %v735 = vmin.f32 %v645, 0.0
        %v736 = vmin.f32 %v650, 0.0
        %v737 = vmin.f32 %v655, 0.0
        %v738 = vmin.f32 %v660, 0.0
        %v739 = vmin.f32 %v665, 0.0
        %v740 = vmin.f32 %v670, 0.0
        %v741 = vmin.f32 %v675, 0.0
        %v742 = vmin.f32 %v680, 0.0
        %v743 = vmin.f32 %v685, 0.0
        %v744 = vmin.f32 %v690, 0.0
        %v745 = vmin.f32 %v695, 0.0
        %v746 = vmul.f32 %v730, 1.442695
        %v747 = vpow.pop %v746
        %v748 = vmul.f32 %v731, 1.442695
        %v749 = vpow.pop %v748
        %v750 = vmul.f32 %v732, 1.442695
        %v751 = vpow.pop %v750
        %v752 = vmul.f32 %v733, 1.442695
        %v753 = vpow.pop %v752
        %v754 = vmul.f32 %v734, 1.442695
        %v755 = vpow.pop %v754
        %v756 = vmul.f32 %v735, 1.442695
        %v757 = vpow.pop %v756
        %v758 = vmul.f32 %v736, 1.442695
        %v759 = vpow.pop %v758
        %v760 = vmul.f32 %v737, 1.442695
        %v761 = vpow.pop %v760
        %v762 = vmul.f32 %v738, 1.442695
        %v763 = vpow.pop %v762
        %v764 = vmul.f32 %v739, 1.442695
        %v765 = vpow.pop %v764
        %v766 = vmul.f32 %v740, 1.442695
        %v767 = vpow.pop %v766
        %v768 = vmul.f32 %v741, 1.442695
        %v769 = vpow.pop %v768
        %v770 = vmul.f32 %v742, 1.442695
        %v771 = vpow.pop %v770
        %v772 = vmul.f32 %v743, 1.442695
        %v773 = vpow.pop %v772
        %v774 = vmul.f32 %v744, 1.442695
        %v775 = vpow.pop %v774
        %v776 = vmul.f32 %v745, 1.442695
        %v777 = vpow.pop %v776
        %v778 = vsel %vm698, %v714, %v747
        %v779 = vsel %vm699, %v715, %v749
        %v780 = vsel %vm700, %v716, %v751
        %v781 = vsel %vm701, %v717, %v753
        %v782 = vsel %vm702, %v718, %v755
        %v783 = vsel %vm703, %v719, %v757
        %v784 = vsel %vm704, %v720, %v759
        %v785 = vsel %vm705, %v721, %v761
        %v786 = vsel %vm706, %v722, %v763
        %v787 = vsel %vm707, %v723, %v765
        %v788 = vsel %vm708, %v724, %v767
        %v789 = vsel %vm709, %v725, %v769
        %v790 = vsel %vm710, %v726, %v771
        %v791 = vsel %vm711, %v727, %v773
        %v792 = vsel %vm712, %v728, %v775
        %v793 = vsel %vm713, %v729, %v777
        %v794 = vmul.f32 %v778, %v213
        %v795 = vmul.f32 %v779, %v214
        %v796 = vmul.f32 %v780, %v213
        %v797 = vmul.f32 %v781, %v214
        %v798 = vmul.f32 %v782, %v213
        %v799 = vmul.f32 %v783, %v214
        %v800 = vmul.f32 %v784, %v213
        %v801 = vmul.f32 %v785, %v214
        %v802 = vmul.f32 %v786, %v213
        %v803 = vmul.f32 %v787, %v214
        %v804 = vmul.f32 %v788, %v213
        %v805 = vmul.f32 %v789, %v214
        %v806 = vmul.f32 %v790, %v213
        %v807 = vmul.f32 %v791, %v214
        %v808 = vmul.f32 %v792, %v213
        %v809 = vmul.f32 %v793, %v214
        %vm810 = vcmask 31744
        %v811 = vsel %vm810, %v794, 0.0
        %812 = vadd.xlane.f32.xlu0 %v811
        %v813 = vpop.xlane.xlu0 %812
        %v814 = vsel %vm810, %v795, 0.0
        %815 = vadd.xlane.f32.xlu0 %v814
        %v816 = vpop.xlane.xlu0 %815
        %v817 = vsel %vm810, %v796, 0.0
        %818 = vadd.xlane.f32.xlu0 %v817
        %v819 = vpop.xlane.xlu0 %818
        %v820 = vsel %vm810, %v797, 0.0
        %821 = vadd.xlane.f32.xlu0 %v820
        %v822 = vpop.xlane.xlu0 %821
        %v823 = vsel %vm810, %v798, 0.0
        %824 = vadd.xlane.f32.xlu0 %v823
        %v825 = vpop.xlane.xlu0 %824
        %v826 = vsel %vm810, %v799, 0.0
        %827 = vadd.xlane.f32.xlu0 %v826
        %v828 = vpop.xlane.xlu0 %827
        %v829 = vsel %vm810, %v800, 0.0
        %830 = vadd.xlane.f32.xlu0 %v829
        %v831 = vpop.xlane.xlu0 %830
        %v832 = vsel %vm810, %v801, 0.0
        %833 = vadd.xlane.f32.xlu0 %v832
        %v834 = vpop.xlane.xlu0 %833
        %v835 = vsel %vm810, %v802, 0.0
        %836 = vadd.xlane.f32.xlu0 %v835
        %v837 = vpop.xlane.xlu0 %836
        %v838 = vsel %vm810, %v803, 0.0
        %839 = vadd.xlane.f32.xlu0 %v838
        %v840 = vpop.xlane.xlu0 %839
        %v841 = vsel %vm810, %v804, 0.0
        %842 = vadd.xlane.f32.xlu0 %v841
        %v843 = vpop.xlane.xlu0 %842
        %v844 = vsel %vm810, %v805, 0.0
        %845 = vadd.xlane.f32.xlu0 %v844
        %v846 = vpop.xlane.xlu0 %845
        %v847 = vsel %vm810, %v806, 0.0
        %848 = vadd.xlane.f32.xlu0 %v847
        %v849 = vpop.xlane.xlu0 %848
        %v850 = vsel %vm810, %v807, 0.0
        %851 = vadd.xlane.f32.xlu0 %v850
        %v852 = vpop.xlane.xlu0 %851
        %v853 = vsel %vm810, %v808, 0.0
        %854 = vadd.xlane.f32.xlu0 %v853
        %v855 = vpop.xlane.xlu0 %854
        %v856 = vsel %vm810, %v809, 0.0
        %857 = vadd.xlane.f32.xlu0 %v856
        %v858 = vpop.xlane.xlu0 %857
        %v859 = vadd.f32 %v813, %v816
        %v860 = vrot.slane %v859, 4
        %v861 = vadd.f32 %v859, %v860
        %v862 = vrot.slane %v861, 2
        %v863 = vadd.f32 %v861, %v862
        %v864 = vrot.slane %v863, 1
        %v865 = vadd.f32 %v863, %v864
        %v866 = vadd.f32 %v819, %v822
        %v867 = vrot.slane %v866, 4
        %v868 = vadd.f32 %v866, %v867
        %v869 = vrot.slane %v868, 2
        %v870 = vadd.f32 %v868, %v869
        %v871 = vrot.slane %v870, 1
        %v872 = vadd.f32 %v870, %v871
        %v873 = vadd.f32 %v825, %v828
        %v874 = vrot.slane %v873, 4
        %v875 = vadd.f32 %v873, %v874
        %v876 = vrot.slane %v875, 2
        %v877 = vadd.f32 %v875, %v876
        %v878 = vrot.slane %v877, 1
        %v879 = vadd.f32 %v877, %v878
        %v880 = vadd.f32 %v831, %v834
        %v881 = vrot.slane %v880, 4
        %v882 = vadd.f32 %v880, %v881
        %v883 = vrot.slane %v882, 2
        %v884 = vadd.f32 %v882, %v883
        %v885 = vrot.slane %v884, 1
        %v886 = vadd.f32 %v884, %v885
        %v887 = vadd.f32 %v837, %v840
        %v888 = vrot.slane %v887, 4
        %v889 = vadd.f32 %v887, %v888
        %v890 = vrot.slane %v889, 2
        %v891 = vadd.f32 %v889, %v890
        %v892 = vrot.slane %v891, 1
        %v893 = vadd.f32 %v891, %v892
        %v894 = vadd.f32 %v843, %v846
        %v895 = vrot.slane %v894, 4
        %v896 = vadd.f32 %v894, %v895
        %v897 = vrot.slane %v896, 2
        %v898 = vadd.f32 %v896, %v897
        %v899 = vrot.slane %v898, 1
        %v900 = vadd.f32 %v898, %v899
        %v901 = vadd.f32 %v849, %v852
        %v902 = vrot.slane %v901, 4
        %v903 = vadd.f32 %v901, %v902
        %v904 = vrot.slane %v903, 2
        %v905 = vadd.f32 %v903, %v904
        %v906 = vrot.slane %v905, 1
        %v907 = vadd.f32 %v905, %v906
        %v908 = vadd.f32 %v855, %v858
        %v909 = vrot.slane %v908, 4
        %v910 = vadd.f32 %v908, %v909
        %v911 = vrot.slane %v910, 2
        %v912 = vadd.f32 %v910, %v911
        %v913 = vrot.slane %v912, 1
        %v914 = vadd.f32 %v912, %v913
        %v915 = vmul.f32 %v217, %v865
        %v916 = vmul.f32 %v217, %v872
        %v917 = vmul.f32 %v217, %v879
        %v918 = vmul.f32 %v217, %v886
        %v919 = vmul.f32 %v217, %v893
        %v920 = vmul.f32 %v217, %v900
        %v921 = vmul.f32 %v217, %v907
        %v922 = vmul.f32 %v217, %v914
        %923 = vrot.lane.b32.xlu0 %v237, 1
        %v924 = vpop.permute.xlu0 %923
        %925 = vrot.lane.b32.xlu0 %v241, 1
        %v926 = vpop.permute.xlu0 %925
        %927 = vrot.lane.b32.xlu0 %v245, 1
        %v928 = vpop.permute.xlu0 %927
        %929 = vrot.lane.b32.xlu0 %v249, 1
        %v930 = vpop.permute.xlu0 %929
        %931 = vrot.lane.b32.xlu0 %v253, 1
        %v932 = vpop.permute.xlu0 %931
        %933 = vrot.lane.b32.xlu0 %v257, 1
        %v934 = vpop.permute.xlu0 %933
        %935 = vrot.lane.b32.xlu0 %v261, 1
        %v936 = vpop.permute.xlu0 %935
        %937 = vrot.lane.b32.xlu0 %v265, 1
        %v938 = vpop.permute.xlu0 %937
        %v947 = vmul.f32 %v915, %v924
        %v948 = vmul.f32 %v916, %v926
        %v949 = vmul.f32 %v917, %v928
        %v950 = vmul.f32 %v918, %v930
        %v951 = vmul.f32 %v919, %v932
        %v952 = vmul.f32 %v920, %v934
        %v953 = vmul.f32 %v921, %v936
        %v954 = vmul.f32 %v922, %v938
        %955 = vrot.lane.b32.xlu0 %v217, 1
        %v956 = vpop.permute.xlu0 %955
        %v958 = vadd.f32 %v947, %v956
        %v959 = vadd.f32 %v948, %v956
        %v960 = vadd.f32 %v949, %v956
        %v961 = vadd.f32 %v950, %v956
        %v962 = vadd.f32 %v951, %v956
        %v963 = vadd.f32 %v952, %v956
        %v964 = vadd.f32 %v953, %v956
        %v965 = vadd.f32 %v954, %v956
        %974 = vrot.lane.b32.xlu0 %v958, 127
        %v975 = vpop.permute.xlu0 %974
        %976 = vrot.lane.b32.xlu0 %v959, 127
        %v977 = vpop.permute.xlu0 %976
        %978 = vrot.lane.b32.xlu0 %v960, 127
        %v979 = vpop.permute.xlu0 %978
        %980 = vrot.lane.b32.xlu0 %v961, 127
        %v981 = vpop.permute.xlu0 %980
        %982 = vrot.lane.b32.xlu0 %v962, 127
        %v983 = vpop.permute.xlu0 %982
        %984 = vrot.lane.b32.xlu0 %v963, 127
        %v985 = vpop.permute.xlu0 %984
        %986 = vrot.lane.b32.xlu0 %v964, 127
        %v987 = vpop.permute.xlu0 %986
        %988 = vrot.lane.b32.xlu0 %v965, 127
        %v989 = vpop.permute.xlu0 %988
        %vm998 = vcmask 0
        %999 = vst.msk [vmem:[%s209] sm:$0x1] %vm998, %v975
        %1000 = vst.msk [vmem:[%s209 + $0x1] sm:$0x1] %vm998, %v977
        %1001 = vst.msk [vmem:[%s209 + $0x2] sm:$0x1] %vm998, %v979
        %1002 = vst.msk [vmem:[%s209 + $0x3] sm:$0x1] %vm998, %v981
        %1003 = vst.msk [vmem:[%s209 + $0x4] sm:$0x1] %vm998, %v983
        %1004 = vst.msk [vmem:[%s209 + $0x5] sm:$0x1] %vm998, %v985
        %1005 = vst.msk [vmem:[%s209 + $0x6] sm:$0x1] %vm998, %v987
        %1006 = vst.msk [vmem:[%s209 + $0x7] sm:$0x1] %vm998, %v989
        %s1007 = smul.u32 8, %s16
        %p1008 = scmp.lt.s32.totalorder %s1007, 15
        %s1009 = scalar_select %p1008, %s1007, 15
        %s1010 = scalar_lea.vmem %s4, %s1009
        // Predicated region
        $region41: #{tpu_custom_call.1} parent=35 // pred_check
          %p1011 = pneg %p123
        $region42: #{tpu_custom_call.1} parent=35 // pred_check_branch
          %1013 = sbr.rel (%p1011) target = $region44
        $region43: #{tpu_custom_call.1} parent=35 // pred_region
          %s1014 = smul.u32 8, %s16
        $region44: #{tpu_custom_call.1} parent=35 // pred_fallthru
          _
      $region36: #{tpu_custom_call.1} parent=5 // pred_fallthru
        _
      %p1015 = scmp.le.s32.totalorder 2, %s11
      // Predicated region
      $region45: #{tpu_custom_call.1} parent=5 // pred_check
        %p1016 = pneg %p1015
      $region46: #{tpu_custom_call.1} parent=5 // pred_check_branch
        %1018 = sbr.rel (%p1016) target = $region48
      $region47: #{tpu_custom_call.1} parent=5 // pred_region
        %s1019 = ssub.s32 %s11, 2
        // Predicated region
        $region49: #{tpu_custom_call.1} parent=47 // pred_check
          %p1020 = pneg %p129
        $region50: #{tpu_custom_call.1} parent=47 // pred_check_branch
          %1022 = sbr.rel (%p1020) target = $region52
        $region51: #{tpu_custom_call.1} parent=47 // pred_region
          %s1023 = smul.u32 8, %s17
          %p1024 = scmp.lt.s32.totalorder %s1023, 15
          %s1025 = scalar_select %p1024, %s1023, 15
          %s1026 = scalar_lea.vmem %s4, %s1025
        $region52: #{tpu_custom_call.1} parent=47 // pred_fallthru
          _
      $region48: #{tpu_custom_call.1} parent=5 // pred_fallthru
        _
    $region6: #{tpu_custom_call.1} parent=1 // loop_footer
      %s15 = sadd.s32 1, %s11
    $region7: #{tpu_custom_call.1} parent=1 // loop_footer_branch
      %10 = sbr.rel target = $region3
    $region8: #{tpu_custom_call.1} parent=1 // loop_exit
      _
    %1027 = vsyncpa [#allocation3], 1
    %s1028 = scalar_lea.sflag [#allocation3], 1
    %1029 = vsyncpa %s1028, 1

</llo_original>
